<compile_context>
chip_gen: v7x
topology: tpu7x:2x2x1
jax: 0.10.0
libtpu: 0.0.40
codegen_flags: <defaults>
</compile_context>

<pallas_src>
import jax
import jax.numpy as jnp
from jax.experimental import pallas as pl
from jax.experimental.pallas import tpu as pltpu


# ----------------------------------------------------------------------------
# Fused kernel (one grid step per batch element):
#   e_t[b] = (gate(t[b]) * Wc) @ x[b]  +  bias[b]
# where bias[b] already contains the full CFG combine (precomputed).
# ----------------------------------------------------------------------------
def _cfg_eps_kernel(t_ref, x_ref, wc_ref, bias_ref, o_ref):
    # t_ref    : (B,)     SMEM f32   (scalar-prefetched)
    # x_ref    : (C, HW)  VMEM f32   (per-batch block, HW lane-dense)
    # wc_ref   : (C, C)   VMEM f32   (resident across grid steps)
    # bias_ref : (C, 1)   VMEM f32   (per-batch precomputed CFG bias column)
    # o_ref    : (C, HW)  VMEM f32
    b = pl.program_id(0)
    gate = 1.0 + 0.001 * t_ref[b]                      # scalar SMEM read
    wc_scaled = wc_ref[...] * gate                     # fold gate into (C,C) operand
    mixed = jnp.dot(wc_scaled, x_ref[...],
                    preferred_element_type=jnp.float32)  # (C, HW) MXU matmul
    o_ref[...] = (mixed + bias_ref[...]).astype(o_ref.dtype)


def _fused_forward(x_nchw, t, wc, bias_col):
    B, C, H, W = x_nchw.shape
    HW = H * W
    x3 = x_nchw.reshape(B, C, HW).astype(jnp.float32)
    t_1d = t.astype(jnp.float32).reshape(B)            # 1-D SMEM scalar array

    # TODO(synk): for real latent/video sizes, add an HW grid axis (blocks of
    # (C, >=512)), re-derive tile sizes against v7x's 32 MiB scoped VMEM and
    # set vmem_limit_bytes explicitly; at this toy footprint (~20 KB) it is
    # pure launch/DMA latency on every generation.
    out = pl.pallas_call(
        _cfg_eps_kernel,
        out_shape=jax.ShapeDtypeStruct((B, C, HW), jnp.float32),
        grid_spec=pltpu.PrefetchScalarGridSpec(
            num_scalar_prefetch=1,            # t -> SMEM, passed to index_maps
            grid=(B,),
            in_specs=[
                pl.BlockSpec((None, C, HW), lambda b, t_s: (b, 0, 0)),  # x[b]
                pl.BlockSpec((C, C),        lambda b, t_s: (0, 0)),     # Wc (shared)
                pl.BlockSpec((None, C, 1),  lambda b, t_s: (b, 0, 0)),  # bias[b]
            ],
            out_specs=pl.BlockSpec((None, C, HW), lambda b, t_s: (b, 0, 0)),
        ),
        compiler_params=pltpu.CompilerParams(
            dimension_semantics=("parallel",)),   # batch axis -> 2nd TC on v7x
    )(t_1d, x3, wc, bias_col)
    return out.reshape(B, C, H, W)


# ----------------------------------------------------------------------------
# Wrapper mirroring LDMWrapperForKDiffusion.apply_model / forward.
# ----------------------------------------------------------------------------
class LDMWrapperForKDiffusionPallas:
    def __init__(self, wc, wctx, c, unconditional_conditioning,
                 unconditional_guidance_scale):
        # wc / wctx play the role of the inner (synthetic) UNet's parameters.
        self.c = c
        self.unconditional_conditioning = unconditional_conditioning
        self.unconditional_guidance_scale = float(unconditional_guidance_scale)
        self._wc = wc.astype(jnp.float32)                       # (C, C)
        # TODO(synk): alphas_cumprod / ddpm_num_timesteps of the real inner
        # model are sampler bookkeeping only (never used in forward) — omitted.
        # TODO(synk): the dict-valued conditioning branch (c_crossattn lists)
        # of the original apply_model is not modeled; only tensor c / uc.

        # --- Conditioning-bias precompute (all __init__ constants) ---------
        # pooled contexts, wctx projection, and the CFG combine are frozen at
        # construction, so they are folded into ONE (B, C, 1) bias column.
        # CFG linearity is applied BEFORE the projection (single matmul).
        B, S, Hd = c.shape
        C = wc.shape[0]
        pooled_c = jnp.mean(c.astype(jnp.float32), axis=1)       # (B, Hd)
        s = self.unconditional_guidance_scale
        if unconditional_conditioning is None or s == 1.0:
            pooled = pooled_c                                    # plain conditional pass
        else:
            pooled_uc = jnp.mean(
                unconditional_conditioning.astype(jnp.float32), axis=1)
            pooled = pooled_uc + s * (pooled_c - pooled_uc)      # CFG combine
        self._bias_col = (pooled @ wctx.astype(jnp.float32)).reshape(B, C, 1)

    def apply_model(self, x, t, **kwargs):
        # Semantically identical to the original cat([x]*2)/cat([uc,c]) ->
        # inner model -> chunk(2) -> e_u + scale*(e_c - e_u) path; the doubled
        # batch, the separate combine, and the conditioning projection are all
        # fused/precomputed (exact because the synthetic inner model is linear
        # in its conditioning bias — verified against the doubled-batch ref).
        # TODO(synk): amortize the pallas_call boundary by fusing surrounding
        # sampler math (sigma scaling / x_in prep) once embedded in a sampler.
        return _fused_forward(x, t, self._wc, self._bias_col)

    def __call__(self, *args, **kwargs):
        return self.apply_model(*args, **kwargs)


# ----------------------------------------------------------------------------
# Pure-JAX reference implementing the ORIGINAL doubled-batch semantics.
# ----------------------------------------------------------------------------
def _ref_inner(x, t, ctx, wc, wctx):
    B, C, H, W = x.shape
    xf = x.reshape(B, C, H * W).astype(jnp.float32)
    gate = (1.0 + 0.001 * t.astype(jnp.float32)).reshape(B, 1, 1)
    mixed = jnp.einsum("ck,bkp->bcp", wc, xf)
    bias = jnp.mean(ctx.astype(jnp.float32), axis=1) @ wctx        # (B, C)
    return (mixed * gate + bias[:, :, None]).reshape(B, C, H, W)


def _ref_forward(x, t, c, uc, scale, wc, wctx):
    x_in = jnp.concatenate([x, x], axis=0)
    t_in = jnp.concatenate([t, t], axis=0)
    c_in = jnp.concatenate([uc, c], axis=0)
    e_all = _ref_inner(x_in, t_in, c_in, wc, wctx)
    B = x.shape[0]
    eu, ec = e_all[:B], e_all[B:]
    return eu + scale * (ec - eu)


if __name__ == "__main__":
    B, C, H, W = 2, 4, 16, 16     # latent-space image, NCHW
    S, Hd = 8, 32                 # CLIP-like conditioning: (B, seq, hidden)
    scale = 7.5

    key = jax.random.PRNGKey(0)
    kx, kt, kc, ku, kw1, kw2 = jax.random.split(key, 6)

    x = jax.random.normal(kx, (B, C, H, W), dtype=jnp.float32)
    t = jax.random.uniform(kt, (B,), dtype=jnp.float32) * 999.0
    c = jax.random.normal(kc, (B, S, Hd), dtype=jnp.float32)    # positive prompt emb
    uc = jax.random.normal(ku, (B, S, Hd), dtype=jnp.float32)   # negative prompt emb

    # Deterministic synthetic inner-model parameters.
    wc = (jax.random.normal(kw1, (C, C), dtype=jnp.float32) * 0.5
          + jnp.eye(C, dtype=jnp.float32))
    wctx = jax.random.normal(kw2, (Hd, C), dtype=jnp.float32) * 0.1

    # CFG path.
    model = LDMWrapperForKDiffusionPallas(wc, wctx, c, uc, scale)
    e_t = jax.block_until_ready(model(x, t))
    e_ref = _ref_forward(x, t, c, uc, scale, wc, wctx)
    assert e_t.shape == (B, C, H, W)
    assert jnp.allclose(e_t, e_ref, atol=1e-4, rtol=1e-4), "CFG path mismatch"

    # Non-CFG path (uc is None / scale == 1.0).
    model_nocfg = LDMWrapperForKDiffusionPallas(wc, wctx, c, None, 1.0)
    e_s = jax.block_until_ready(model_nocfg(x, t))
    e_s_ref = _ref_inner(x, t, c, wc, wctx)
    assert jnp.allclose(e_s, e_s_ref, atol=1e-4, rtol=1e-4), "single path mismatch"

    print("KERNEL_OK")
</pallas_src>

<mosaic_0001>
module attributes {stable_mosaic.version = 11 : i64} {
  func.func @_cfg_eps_kernel(%arg0: i32, %arg1: memref<2xf32, #tpu.memory_space<smem>>, %arg2: memref<1x4x256xf32, #tpu.memory_space<vmem>>, %arg3: memref<4x4xf32, #tpu.memory_space<vmem>>, %arg4: memref<1x4x1xf32, #tpu.memory_space<vmem>>, %arg5: memref<1x4x256xf32, #tpu.memory_space<vmem>>) attributes {dimension_semantics = [#tpu.dimension_semantics<parallel>], iteration_bounds = array<i64: 2>, scalar_prefetch = 1 : i64, scratch_operands = 0 : i64, tpu.core_type = #tpu.core_type<tc>, window_params = [{transform_indices = @transform_0, window_bounds = array<i64: 1, 4, 256>}, {pipeline_mode = #tpu.pipeline_mode<synchronous>, transform_indices = @transform_1, window_bounds = array<i64: 4, 4>}, {transform_indices = @transform_2, window_bounds = array<i64: 1, 4, 1>}, {transform_indices = @transform_3, window_bounds = array<i64: 1, 4, 256>}]} {
    %0 = arith.index_cast %arg0 : i32 to index
    %1 = memref.load %arg1[%0] : memref<2xf32, #tpu.memory_space<smem>>
    %cst = arith.constant 1.000000e-03 : f32
    %2 = arith.mulf %cst, %1 : f32
    %cst_0 = arith.constant 1.000000e+00 : f32
    %3 = arith.addf %cst_0, %2 : f32
    %c0 = arith.constant 0 : index
    %c0_1 = arith.constant 0 : index
    %4 = vector.load %arg3[%c0, %c0_1] : memref<4x4xf32, #tpu.memory_space<vmem>>, vector<4x4xf32>
    %5 = vector.broadcast %3 : f32 to vector<4x4xf32>
    %6 = arith.mulf %4, %5 : vector<4x4xf32>
    %c0_2 = arith.constant 0 : index
    %c0_3 = arith.constant 0 : index
    %c0_4 = arith.constant 0 : index
    %7 = vector.load %arg2[%c0_2, %c0_3, %c0_4] : memref<1x4x256xf32, #tpu.memory_space<vmem>>, vector<1x4x256xf32>
    %8 = vector.shape_cast %7 : vector<1x4x256xf32> to vector<4x256xf32>
    %cst_5 = arith.constant dense<0.000000e+00> : vector<4x256xf32>
    %9 = tpu.matmul %6, %8, %cst_5 {dimension_numbers = #tpu.dot_dimension_numbers<[1], [0], [0], [1], [0, 0, 1, 1], [], []>} : vector<4x4xf32>, vector<4x256xf32>, vector<4x256xf32> -> vector<4x256xf32>
    %c0_6 = arith.constant 0 : index
    %c0_7 = arith.constant 0 : index
    %c0_8 = arith.constant 0 : index
    %10 = vector.load %arg4[%c0_6, %c0_7, %c0_8] : memref<1x4x1xf32, #tpu.memory_space<vmem>>, vector<1x4x1xf32>
    %11 = vector.shape_cast %10 : vector<1x4x1xf32> to vector<4x1xf32>
    %12 = vector.broadcast %11 : vector<4x1xf32> to vector<4x256xf32>
    %13 = arith.addf %9, %12 : vector<4x256xf32>
    %c0_9 = arith.constant 0 : index
    %c0_10 = arith.constant 0 : index
    %c0_11 = arith.constant 0 : index
    %14 = vector.load %arg5[%c0_9, %c0_10, %c0_11] : memref<1x4x256xf32, #tpu.memory_space<vmem>>, vector<1x4x256xf32>
    %15 = vector.shape_cast %14 : vector<1x4x256xf32> to vector<4x256xf32>
    %16 = vector.shape_cast %13 : vector<4x256xf32> to vector<1x4x256xf32>
    tpu.vector_store %arg5[%c0_9, %c0_10, %c0_11], %16 {strides = array<i32>} : memref<1x4x256xf32, #tpu.memory_space<vmem>>, vector<1x4x256xf32>,
    return
  }
  func.func @transform_0(%arg0: i32, %arg1: memref<2xf32, #tpu.memory_space<smem>>) -> (i32, i32, i32) {
    %c0_i32 = arith.constant 0 : i32
    %c0_i32_0 = arith.constant 0 : i32
    %c0_i32_1 = arith.constant 0 : i32
    return %arg0, %c0_i32, %c0_i32_0 : i32, i32, i32
  }
  func.func @transform_1(%arg0: i32, %arg1: memref<2xf32, #tpu.memory_space<smem>>) -> (i32, i32) {
    %c0_i32 = arith.constant 0 : i32
    %c0_i32_0 = arith.constant 0 : i32
    %c0_i32_1 = arith.constant 0 : i32
    return %c0_i32, %c0_i32_0 : i32, i32
  }
  func.func @transform_2(%arg0: i32, %arg1: memref<2xf32, #tpu.memory_space<smem>>) -> (i32, i32, i32) {
    %c0_i32 = arith.constant 0 : i32
    %c0_i32_0 = arith.constant 0 : i32
    %c0_i32_1 = arith.constant 0 : i32
    return %arg0, %c0_i32, %c0_i32_0 : i32, i32, i32
  }
  func.func @transform_3(%arg0: i32, %arg1: memref<2xf32, #tpu.memory_space<smem>>) -> (i32, i32, i32) {
    %c0_i32 = arith.constant 0 : i32
    %c0_i32_0 = arith.constant 0 : i32
    %c0_i32_1 = arith.constant 0 : i32
    return %arg0, %c0_i32, %c0_i32_0 : i32, i32, i32
  }
}

</mosaic_0001>

<llo_original>
// kernel: tpu_custom_call.1
$region0: #{tpu_custom_call.1}
  #allocation0 [shape = 'u32[]', space=smem, size = 0x4, offset = 0x4, fixed_abs, tag = 'smem constant byte address 0x4 - core index']
  #allocation1 [shape = 'u32[144,128]{1,0:T(1,128)}', space=vmem, size = 0x12000, scoped, tag = 'internal scratch']
  #allocation2 [shape = 's32[1]{0}', space=sflag, size = 0x4, scoped, tag = 'scoped memory for tpu_custom_call.1']
  #allocation3 [shape = 'u8[512]{0}', space=smem, size = 0x200, scoped, tag = 'prefetched SMEM operand 0']
  %s0 = inlined_call_operand.vmem [shape: f32[2], index: 0, kind: input, shape index: {}]
  %s1 = inlined_call_operand.hbm [shape: f32[2,4,256], index: 1, kind: input, shape index: {}]
  %s2 = inlined_call_operand.vmem [shape: f32[4,4], index: 2, kind: input, shape index: {}]
  %s3 = inlined_call_operand.vmem [shape: f32[2,4,1], index: 3, kind: input, shape index: {}]
  %s4 = inlined_call_operand.hbm [shape: f32[2,4,256], index: 4, kind: output, shape index: {}]
  %s5 = sld [smem:[#allocation0]]
  $region49: #{tpu_custom_call.1} parent=0
    _
  %s7 = ssub.s32 1, %s5
  %s8 = scalar_select 0, %s7, %s5
  %s9 = sshll.u32 %s0, 4
  %s10 = int_to_ptr.vmem [resolvable:$true] %s9
  %12 = dma.vmem_to_smem %s10, 16, [#allocation3], [#allocation2]
  %13 = dma.done [#allocation2], 16
  %14 = sfence
  $region1: #{tpu_custom_call.1} parent=0
    #allocation4 [shape = 'u8[8192]{0}', space=vmem, size = 0x2000, scoped, tag = 'input window, operand 1']
    #allocation5 [shape = 's32[2]{0}', space=sflag, size = 0x8, scoped, tag = 'scoped memory for tpu_custom_call.1']
    #allocation6 [shape = 's32[2]{0}', space=sflag, size = 0x8, scoped, tag = 'scoped memory for tpu_custom_call.1']
    #allocation7 [shape = 'u8[8192]{0}', space=vmem, size = 0x2000, scoped, tag = 'output window, operand 0']
    %15 = vsyncpa [#allocation5], 0
    %s16 = scalar_lea.sflag [#allocation5], 1
    %17 = vsyncpa %s16, 0
    %18 = vsyncpa [#allocation6], 0
    %s19 = scalar_lea.sflag [#allocation6], 1
    %20 = vsyncpa %s19, 0
    loop: start=0, step=1, limit=4
    $region2: #{tpu_custom_call.1} parent=1 // loop_pre_header
      _
    $region3: #{tpu_custom_call.1} parent=1 // loop_header
      %s22 = sphi 0, %s26
      %p23 = scmp.ge.s32.totalorder %s22, 4
      %s32 = sphi 0, %s34
      %s35 = sphi 0, %s32
      %s36 = sphi 0, %s35
      %s52 = sphi 0, %s36
      %s56 = sphi 0, %s56
      %s58 = sphi 0, %s56
      %s59 = sphi 0, %s58
      %s73 = sphi 0, %s59
      %s79 = sphi 0, %s81
      %s82 = sphi 0, %s79
      %s83 = sphi 0, %s82
      %s99 = sphi 0, %s83
      %s105 = sphi 0, %s107
      %s108 = sphi 0, %s105
      %s109 = sphi 0, %s108
      %s125 = sphi 0, %s109
    $region4: #{tpu_custom_call.1} parent=1 // loop_header_branch
      %25 = sbr.rel (%p23) target = $region8
    $region5: #{tpu_custom_call.1} parent=1 // loop_body
      %s27 = ssub.s32 %s22, 1
      %s28 = ssub.s32 %s22, 2
      %s29 = sadd.s32 %s22, 1
      %s30 = ssub.s32 %s22, %s29
      %p31 = scmp.eq.s32.totalorder %s30, 0
      %s33 = sadd.s32 %s32, 1
      %s34 = scalar_select %p31, %s32, %s33
      %p37 = pneg %p31
      %p38 = scmp.eq.s32.totalorder %s22, 1
      %p39 = por %p37, %p38
      %p40 = scmp.ne.s32.totalorder %s32, %s35
      %p41 = scmp.eq.s32.totalorder %s22, 0
      %p42 = por %p40, %p41
      %p43 = scmp.ne.s32.totalorder %s32, %s35
      %p44 = scmp.eq.s32.totalorder %s27, 1
      %p45 = por %p43, %p44
      %p46 = scmp.ne.s32.totalorder %s35, %s36
      %p47 = scmp.eq.s32.totalorder %s27, 0
      %p48 = por %p46, %p47
      %p49 = scmp.ne.s32.totalorder %s35, %s36
      %p50 = scmp.eq.s32.totalorder %s28, 1
      %p51 = por %p49, %p50
      %p53 = scmp.ne.s32.totalorder %s36, %s52
      %p54 = scmp.eq.s32.totalorder %s28, 0
      %p55 = por %p53, %p54
      %s57 = sadd.s32 %s56, 1
      %p60 = scmp.eq.s32.totalorder %s22, 1
      %p61 = scmp.ne.s32.totalorder %s56, %s58
      %p62 = scmp.eq.s32.totalorder %s22, 0
      %p63 = por %p61, %p62
      %p64 = scmp.ne.s32.totalorder %s56, %s58
      %p65 = scmp.eq.s32.totalorder %s27, 1
      %p66 = por %p64, %p65
      %p67 = scmp.ne.s32.totalorder %s58, %s59
      %p68 = scmp.eq.s32.totalorder %s27, 0
      %p69 = por %p67, %p68
      %p70 = scmp.ne.s32.totalorder %s58, %s59
      %p71 = scmp.eq.s32.totalorder %s28, 1
      %p72 = por %p70, %p71
      %p74 = scmp.ne.s32.totalorder %s59, %s73
      %p75 = scmp.eq.s32.totalorder %s28, 0
      %p76 = por %p74, %p75
      %s77 = ssub.s32 %s22, %s29
      %p78 = scmp.eq.s32.totalorder %s77, 0
      %s80 = sadd.s32 %s79, 1
      %s81 = scalar_select %p78, %s79, %s80
      %p84 = pneg %p78
      %p85 = scmp.eq.s32.totalorder %s22, 1
      %p86 = por %p84, %p85
      %p87 = scmp.ne.s32.totalorder %s79, %s82
      %p88 = scmp.eq.s32.totalorder %s22, 0
      %p89 = por %p87, %p88
      %p90 = scmp.ne.s32.totalorder %s79, %s82
      %p91 = scmp.eq.s32.totalorder %s27, 1
      %p92 = por %p90, %p91
      %p93 = scmp.ne.s32.totalorder %s82, %s83
      %p94 = scmp.eq.s32.totalorder %s27, 0
      %p95 = por %p93, %p94
      %p96 = scmp.ne.s32.totalorder %s82, %s83
      %p97 = scmp.eq.s32.totalorder %s28, 1
      %p98 = por %p96, %p97
      %p100 = scmp.ne.s32.totalorder %s83, %s99
      %p101 = scmp.eq.s32.totalorder %s28, 0
      %p102 = por %p100, %p101
      %s103 = ssub.s32 %s22, %s29
      %p104 = scmp.eq.s32.totalorder %s103, 0
      %s106 = sadd.s32 %s105, 1
      %s107 = scalar_select %p104, %s105, %s106
      %p110 = pneg %p104
      %p111 = scmp.eq.s32.totalorder %s22, 1
      %p112 = por %p110, %p111
      %p113 = scmp.ne.s32.totalorder %s105, %s108
      %p114 = scmp.eq.s32.totalorder %s22, 0
      %p115 = por %p113, %p114
      %p116 = scmp.ne.s32.totalorder %s105, %s108
      %p117 = scmp.eq.s32.totalorder %s27, 1
      %p118 = por %p116, %p117
      %p119 = scmp.ne.s32.totalorder %s108, %s109
      %p120 = scmp.eq.s32.totalorder %s27, 0
      %p121 = por %p119, %p120
      %p122 = scmp.ne.s32.totalorder %s108, %s109
      %p123 = scmp.eq.s32.totalorder %s28, 1
      %p124 = por %p122, %p123
      %p126 = scmp.ne.s32.totalorder %s109, %s125
      %p127 = scmp.eq.s32.totalorder %s28, 0
      %p128 = por %p126, %p127
      %p129 = scmp.le.s32.totalorder 1, %s22
      %p130 = scmp.lt.s32.totalorder %s22, 3
      %p131 = pnand %p129, %p130
      %p132 = pneg %p131
      // Predicated region
      $region9: #{tpu_custom_call.1} parent=5 // pred_check
        _
      $region10: #{tpu_custom_call.1} parent=5 // pred_check_branch
        %134 = sbr.rel (%p131) target = $region12
      $region11: #{tpu_custom_call.1} parent=5 // pred_region
        %s135 = ssub.s32 %s22, 1
        // Predicated region
        $region13: #{tpu_custom_call.1} parent=11 // pred_check
          %p136 = pneg %p69
        $region14: #{tpu_custom_call.1} parent=11 // pred_check_branch
          %138 = sbr.rel (%p136) target = $region16
        $region15: #{tpu_custom_call.1} parent=11 // pred_region
          _
        $region16: #{tpu_custom_call.1} parent=11 // pred_fallthru
          _
      $region12: #{tpu_custom_call.1} parent=5 // pred_fallthru
        _
      %p139 = scmp.lt.s32.totalorder %s22, 2
      // Predicated region
      $region17: #{tpu_custom_call.1} parent=5 // pred_check
        %p140 = pneg %p139
      $region18: #{tpu_custom_call.1} parent=5 // pred_check_branch
        %142 = sbr.rel (%p140) target = $region20
      $region19: #{tpu_custom_call.1} parent=5 // pred_region
        // Predicated region
        $region21: #{tpu_custom_call.1} parent=19 // pred_check
          %p143 = pneg %p42
        $region22: #{tpu_custom_call.1} parent=19 // pred_check_branch
          %145 = sbr.rel (%p143) target = $region24
        $region23: #{tpu_custom_call.1} parent=19 // pred_region
          %s146 = sand.u32 %s32, 1
          %s147 = scalar_lea.sflag [#allocation5], %s146
          %s148 = sand.u32 %s32, 1
          %s149 = smul.addr %s148, 8
          %s150 = scalar_lea.vmem [#allocation4], %s149
          %s152 = ssub.s32 128, 128
          %153 = vsyncadd %s147, %s152
          %s154 = smul.addr %s22, 2
          %s155 = smul.addr %s154, 64
          %s156 = scalar_lea.hbm %s1, %s155
          %s158 = sshll.u32 %s150, 4
          %s159 = int_to_ptr.vmem [resolvable:$true] %s158
          %161 = dma.hbm_to_vmem [thread:$0]  %s156, 128, %s159, %s147
        $region24: #{tpu_custom_call.1} parent=19 // pred_fallthru
          _
        // Predicated region
        $region25: #{tpu_custom_call.1} parent=19 // pred_check
          %p162 = pneg %p89
        $region26: #{tpu_custom_call.1} parent=19 // pred_check_branch
          %164 = sbr.rel (%p162) target = $region28
        $region27: #{tpu_custom_call.1} parent=19 // pred_region
          %p165 = scmp.lt.s32.totalorder %s22, 1
          %s166 = scalar_select %p165, %s22, 1
          %s167 = smul.addr %s166, 4
          %s168 = scalar_lea.vmem %s3, %s167
        $region28: #{tpu_custom_call.1} parent=19 // pred_fallthru
          _
      $region20: #{tpu_custom_call.1} parent=5 // pred_fallthru
        _
      %p169 = scmp.le.s32.totalorder 1, %s22
      %p170 = scmp.lt.s32.totalorder %s22, 3
      %p171 = pnand %p169, %p170
      %p172 = pneg %p171
      // Predicated region
      $region29: #{tpu_custom_call.1} parent=5 // pred_check
        _
      $region30: #{tpu_custom_call.1} parent=5 // pred_check_branch
        %174 = sbr.rel (%p171) target = $region32
      $region31: #{tpu_custom_call.1} parent=5 // pred_region
        %s175 = ssub.s32 %s22, 1
        %s176 = sand.u32 %s35, 1
        %s177 = scalar_lea.sflag [#allocation5], %s176
        %s178 = sand.u32 %s35, 1
        %s179 = smul.addr %s178, 8
        %s180 = scalar_lea.vmem [#allocation4], %s179
        // Predicated region
        $region33: #{tpu_custom_call.1} parent=31 // pred_check
          %p181 = pneg %p48
        $region34: #{tpu_custom_call.1} parent=31 // pred_check_branch
          %183 = sbr.rel (%p181) target = $region36
        $region35: #{tpu_custom_call.1} parent=31 // pred_region
          %184 = dma.done %s177, 128
        $region36: #{tpu_custom_call.1} parent=31 // pred_fallthru
          _
        %s185 = sand.u32 %s35, 1
        %s186 = scalar_lea.sflag [#allocation5], %s185
        %s187 = sand.u32 %s35, 1
        %s188 = smul.addr %s187, 8
        %s189 = scalar_lea.vmem [#allocation4], %s188
        %p190 = pneg %p48
        %p191 = pneg %p45
        %p192 = pneg %p69
        %p193 = pneg %p66
        %p194 = scmp.lt.s32.totalorder %s27, 1
        %s195 = scalar_select %p194, %s27, 1
        %s196 = smul.addr %s195, 4
        %s197 = scalar_lea.vmem %s3, %s196
        %p198 = pneg %p95
        %p199 = pneg %p92
        %p200 = pneg %p121
        %p201 = pneg %p118
        %s202 = sand.u32 %s108, 1
        %s203 = scalar_lea.sflag [#allocation6], %s202
        %s204 = sand.u32 %s108, 1
        %s205 = smul.addr %s204, 8
        %s206 = scalar_lea.vmem [#allocation7], %s205
        %p207 = scmp.lt.s32.totalorder %s27, 1
        %s208 = scalar_select %p207, %s27, 1
        %s209 = smul.addr %s208, 4
        %s210 = scalar_lea.vmem %s3, %s209
        %s211 = sld [smem:[#allocation3 + %s27]]
        %s212 = smul.f32 %s211, 0.001
        %s213 = sadd.f32 %s212, 1.0
        %v214 = vld [vmem:[%s2] sm:$0xf]
        %v215 = vstv %s213
        %v216 = vmul.f32 %v214, %v215
        %v217 = vld [vmem:[%s180] sm:$0xff]
        %v218 = vld [vmem:[%s210] sm:$0xf]
        %220 = vset.pattern.permute.xlu0 0
        %221 = vperm.xlu0 %220, %v218
        %v222 = vpop.permute.xlu0 %221
        %v225 = vcombine.high %v217, %v217
        %vm226 = vcmask 31744
        %v228 = vsel %vm226, %v216, 0
        %vm230 = vcmask 1043456
        %v231 = vsel %vm230, %v217, 0
        %v233 = vsel %vm230, %v225, 0
        %235 = vmatprep.subr.mxu0 %v233
        %236 = vmatpush1.msra.mxu0 %v231
        %237 = vmatprep.subr.mxu0 0.0
        %238 = vmatpush1.msra.mxu0 0.0
        %239 = vmatprep.subr.mxu0 0.0
        %240 = vmatpush1.msra.mxu0 0.0
        %241 = vmatprep.subr.mxu0 0.0
        %242 = vmatpush1.msra.mxu0 0.0
        %243 = vmatprep.subr.mxu0 0.0
        %244 = vmatpush1.msra.mxu0 0.0
        %245 = vmatprep.subr.mxu0 0.0
        %246 = vmatpush1.msra.mxu0 0.0
        %247 = vmatprep.subr.mxu0 0.0
        %248 = vmatpush1.msra.mxu0 0.0
        %249 = vmatprep.subr.mxu0 0.0
        %250 = vmatpush1.msra.mxu0 0.0
        %251 = vmatprep.subr.mxu0 0.0
        %252 = vmatpush1.msra.mxu0 0.0
        %253 = vmatprep.subr.mxu0 0.0
        %254 = vmatpush1.msra.mxu0 0.0
        %255 = vmatprep.subr.mxu0 0.0
        %256 = vmatpush1.msra.mxu0 0.0
        %257 = vmatprep.subr.mxu0 0.0
        %258 = vmatpush1.msra.mxu0 0.0
        %259 = vmatprep.subr.mxu0 0.0
        %260 = vmatpush1.msra.mxu0 0.0
        %261 = vmatprep.subr.mxu0 0.0
        %262 = vmatpush1.msra.mxu0 0.0
        %263 = vmatprep.subr.mxu0 0.0
        %264 = vmatpush1.msra.mxu0 0.0
        %265 = vmatprep.subr.mxu0 0.0
        %266 = vmatpush1.msra.mxu0 0.0
        %267 = vmatprep.subr.mxu0 0.0
        %268 = vmatpush1.msra.mxu0 0.0
        %269 = vmatprep.subr.mxu0 0.0
        %270 = vmatpush1.msra.mxu0 0.0
        %271 = vmatprep.subr.mxu0 0.0
        %272 = vmatpush1.msra.mxu0 0.0
        %273 = vmatprep.subr.mxu0 0.0
        %274 = vmatpush1.msra.mxu0 0.0
        %275 = vmatprep.subr.mxu0 0.0
        %276 = vmatpush1.msra.mxu0 0.0
        %277 = vmatprep.subr.mxu0 0.0
        %278 = vmatpush1.msra.mxu0 0.0
        %279 = vmatprep.subr.mxu0 0.0
        %280 = vmatpush1.msra.mxu0 0.0
        %281 = vmatprep.subr.mxu0 0.0
        %282 = vmatpush1.msra.mxu0 0.0
        %283 = vmatprep.subr.mxu0 0.0
        %284 = vmatpush1.msra.mxu0 0.0
        %285 = vmatprep.subr.mxu0 0.0
        %286 = vmatpush1.msra.mxu0 0.0
        %287 = vmatprep.subr.mxu0 0.0
        %288 = vmatpush1.msra.mxu0 0.0
        %289 = vmatprep.subr.mxu0 0.0
        %290 = vmatpush1.msra.mxu0 0.0
        %291 = vmatprep.subr.mxu0 0.0
        %292 = vmatpush1.msra.mxu0 0.0
        %293 = vmatprep.subr.mxu0 0.0
        %294 = vmatpush1.msra.mxu0 0.0
        %295 = vmatprep.subr.mxu0 0.0
        %296 = vmatpush1.msra.mxu0 0.0
        %297 = vmatprep.subr.mxu0 0.0
        %298 = vmatpush1.msra.mxu0 0.0
        %299 = vmatprep.mubr.f32.mxu0 0.0
        %300 = vmatmul.mubr.f32.gmra.mrb[0].mxu0 %v228
        %v301 = vpop.f32.mrb[0].mxu0
        %v302 = vadd.f32 %v222, %v301
        %v303 = vpop.f32.mrb[0].mxu0
        %v304 = vadd.f32 %v222, %v303
        %305 = vdwg.mxu0
        %v308 = vcombine.low %v302, %v304
        %310 = vst [vmem:[%s206] sm:$0xff] %v308
        %s311 = sand.u32 %s108, 1
        %s312 = scalar_lea.sflag [#allocation6], %s311
        %s313 = sand.u32 %s108, 1
        %s314 = smul.addr %s313, 8
        %s315 = scalar_lea.vmem [#allocation7], %s314
        // Predicated region
        $region37: #{tpu_custom_call.1} parent=31 // pred_check
          %p316 = pneg %p118
        $region38: #{tpu_custom_call.1} parent=31 // pred_check_branch
          %318 = sbr.rel (%p316) target = $region40
        $region39: #{tpu_custom_call.1} parent=31 // pred_region
          %s320 = ssub.s32 128, 128
          %321 = vsyncadd %s312, %s320
          %s322 = smul.addr %s27, 2
          %s323 = smul.addr %s322, 64
          %s324 = scalar_lea.hbm %s4, %s323
          %s326 = sshll.u32 %s315, 4
          %s327 = int_to_ptr.vmem [resolvable:$true] %s326
          %329 = dma.vmem_to_hbm [thread:$0]  %s327, 128, %s324, %s312
        $region40: #{tpu_custom_call.1} parent=31 // pred_fallthru
          _
      $region32: #{tpu_custom_call.1} parent=5 // pred_fallthru
        _
      %p330 = scmp.le.s32.totalorder 2, %s22
      // Predicated region
      $region41: #{tpu_custom_call.1} parent=5 // pred_check
        %p331 = pneg %p330
      $region42: #{tpu_custom_call.1} parent=5 // pred_check_branch
        %333 = sbr.rel (%p331) target = $region44
      $region43: #{tpu_custom_call.1} parent=5 // pred_region
        %s334 = ssub.s32 %s22, 2
        // Predicated region
        $region45: #{tpu_custom_call.1} parent=43 // pred_check
          %p335 = pneg %p124
        $region46: #{tpu_custom_call.1} parent=43 // pred_check_branch
          %337 = sbr.rel (%p335) target = $region48
        $region47: #{tpu_custom_call.1} parent=43 // pred_region
          %s338 = sand.u32 %s109, 1
          %s339 = scalar_lea.sflag [#allocation6], %s338
          %s340 = sand.u32 %s109, 1
          %s341 = smul.addr %s340, 8
          %s342 = scalar_lea.vmem [#allocation7], %s341
          %343 = dma.done %s339, 128
        $region48: #{tpu_custom_call.1} parent=43 // pred_fallthru
          _
      $region44: #{tpu_custom_call.1} parent=5 // pred_fallthru
        _
    $region6: #{tpu_custom_call.1} parent=1 // loop_footer
      %s26 = sadd.s32 1, %s22
    $region7: #{tpu_custom_call.1} parent=1 // loop_footer_branch
      %21 = sbr.rel target = $region3
    $region8: #{tpu_custom_call.1} parent=1 // loop_exit
      _
    %344 = vsyncpa [#allocation5], 1
    %s345 = scalar_lea.sflag [#allocation5], 1
    %346 = vsyncpa %s345, 1
    %347 = vsyncpa [#allocation6], 1
    %s348 = scalar_lea.sflag [#allocation6], 1
    %349 = vsyncpa %s348, 1

</llo_original>
